<compile_context>
chip_gen: v5e
topology: v5e:2x2
jax: 0.10.0
libtpu: 0.0.40
codegen_flags: <defaults>
</compile_context>

<pallas_src>
import functools

import jax
import jax.numpy as jnp
from jax.experimental import pallas as pl
from jax.experimental.pallas import tpu as pltpu


# ---------------------------------------------------------------------------
# Pallas kernel: whole sequence in one invocation.
#   conv-as-matmul (bf16 MXU) -> ReLU -> per-timestep avg pool -> batched FC
# ---------------------------------------------------------------------------
def _backbone_kernel(p_ref, wc_ref, bc_ref, wf_ref, bf_ref, o_ref):
    # p_ref : (CK, T*HW)     bf16  im2col patches, (t,h,w) lane-dense
    # wc_ref: (Cout, CK)     bf16  conv weight (flattened, matmul form)
    # bc_ref: (Cout, 1)      f32   conv bias (broadcast over lanes)
    # wf_ref: (Cout, latent) f32   fc weight
    # bf_ref: (1, latent)    f32   fc bias
    # o_ref : (T, latent)    f32   all-timestep output (single store)
    T = o_ref.shape[0]
    THW = p_ref.shape[1]
    HW = THW // T

    # 3x3 convolution for all timesteps as ONE dense MXU matmul (bf16 in, f32 acc).
    feat = jnp.dot(wc_ref[...], p_ref[...],
                   preferred_element_type=jnp.float32)          # (Cout, T*HW) f32

    # Bias + ReLU in f32 on fully-dense vregs.
    feat = jnp.maximum(feat + bc_ref[...], 0.0)                 # (Cout, T*HW)

    # Global average pool per timestep: lane reductions over 256-lane aligned chunks.
    cols = [
        jnp.sum(feat[:, t * HW:(t + 1) * HW], axis=-1, keepdims=True)  # (Cout, 1)
        for t in range(T)
    ]
    pooled_ct = jnp.concatenate(cols, axis=-1) * jnp.float32(1.0 / HW)  # (Cout, T)

    # Batched fully-connected layer across all timesteps (one MXU push).
    pooled = pooled_ct.T                                        # (T, Cout) tiny transpose
    out = jnp.dot(pooled, wf_ref[...],
                  preferred_element_type=jnp.float32) + bf_ref[...]     # (T, latent)

    o_ref[...] = out.astype(o_ref.dtype)


def _im2col_lane_dense(x, k=3, pad=1):
    """(T, C, H, W) -> (C*k*k, T*H*W), stride 1, zero padding.

    Row order is (c, kh, kw)  (matches conv_w.reshape(Cout, C*k*k)).
    Column order is (t, h, w) so each timestep owns a contiguous, 128-aligned
    block of HW lanes. Layout is emitted directly (no extra transpose pass).
    """
    T, C, H, W = x.shape
    xp = jnp.pad(x, ((0, 0), (0, 0), (pad, pad), (pad, pad)))
    xp = jnp.transpose(xp, (1, 0, 2, 3))                 # (C, T, H+2, W+2)
    slabs = []
    for di in range(k):          # kh
        for dj in range(k):      # kw
            slabs.append(xp[:, :, di:di + H, dj:dj + W])  # (C, T, H, W)
    patches = jnp.stack(slabs, axis=1)                    # (C, k*k, T, H, W)
    return patches.reshape(C * k * k, T * H * W)          # (CK, T*HW)


@functools.partial(jax.jit, static_argnames=("latent_dim",))
def conv_lstm_forward(x, conv_w, conv_b, fc_w, fc_b, *, latent_dim):
    """ConvLstm.forward: x (timesteps, C, H, W) -> (timesteps, latent_dim)."""
    # batch_size = 1; view(batch*timesteps, C, H, W) is a no-op on shapes here.
    T, C, H, W = x.shape
    K = 3
    THW = T * H * W
    CK = C * K * K
    Cout = conv_w.shape[0]

    # bf16 operands for the MXU conv matmul; everything else stays f32.
    patches = _im2col_lane_dense(x, k=K, pad=1).astype(jnp.bfloat16)   # (CK, THW)
    wc = conv_w.reshape(Cout, CK).astype(jnp.bfloat16)                 # (Cout, CK)
    bc = conv_b.reshape(Cout, 1).astype(jnp.float32)                   # (Cout, 1)
    wf = fc_w.T.astype(jnp.float32)                                    # (Cout, latent)
    bf = fc_b.reshape(1, latent_dim).astype(jnp.float32)               # (1, latent)

    out = pl.pallas_call(
        _backbone_kernel,
        out_shape=jax.ShapeDtypeStruct((T, latent_dim), jnp.float32),
        grid_spec=pltpu.PrefetchScalarGridSpec(
            num_scalar_prefetch=0,
            grid=(1,),
            in_specs=[
                pl.BlockSpec((CK, THW), lambda i: (0, 0)),
                pl.BlockSpec((Cout, CK), lambda i: (0, 0)),
                pl.BlockSpec((Cout, 1), lambda i: (0, 0)),
                pl.BlockSpec((Cout, latent_dim), lambda i: (0, 0)),
                pl.BlockSpec((1, latent_dim), lambda i: (0, 0)),
            ],
            out_specs=pl.BlockSpec((T, latent_dim), lambda i: (0, 0)),
        ),
        compiler_params=pltpu.CompilerParams(
            dimension_semantics=("arbitrary",)),
    )(patches, wc, bc, wf, bf)

    return out                                                         # (T, latent)


if __name__ == "__main__":
    latent_dim = 32
    timesteps, C, H, W = 8, 3, 16, 16
    Cout = 16
    K = 3

    key = jax.random.PRNGKey(0)
    k_x, k_cw, k_cb, k_fw, k_fb = jax.random.split(key, 5)

    x = jax.random.normal(k_x, (timesteps, C, H, W), dtype=jnp.float32)
    conv_w = jax.random.normal(k_cw, (Cout, C, K, K), dtype=jnp.float32) * 0.1
    conv_b = jax.random.normal(k_cb, (Cout,), dtype=jnp.float32) * 0.1
    fc_w = jax.random.normal(k_fw, (latent_dim, Cout), dtype=jnp.float32) * 0.1
    fc_b = jax.random.normal(k_fb, (latent_dim,), dtype=jnp.float32) * 0.1

    out = conv_lstm_forward(x, conv_w, conv_b, fc_w, fc_b, latent_dim=latent_dim)
    out = jax.block_until_ready(out)
    assert out.shape == (timesteps, latent_dim), out.shape
    print("KERNEL_OK")
</pallas_src>

<mosaic_0001>
module attributes {stable_mosaic.version = 11 : i64} {
  func.func @_backbone_kernel(%arg0: i32, %arg1: memref<27x2048xbf16, #tpu.memory_space<vmem>>, %arg2: memref<16x27xbf16, #tpu.memory_space<vmem>>, %arg3: memref<16x1xf32, #tpu.memory_space<vmem>>, %arg4: memref<16x32xf32, #tpu.memory_space<vmem>>, %arg5: memref<1x32xf32, #tpu.memory_space<vmem>>, %arg6: memref<8x32xf32, #tpu.memory_space<vmem>>) attributes {dimension_semantics = [#tpu.dimension_semantics<arbitrary>], iteration_bounds = array<i64: 1>, scalar_prefetch = 0 : i64, scratch_operands = 0 : i64, tpu.core_type = #tpu.core_type<tc>, window_params = [{pipeline_mode = #tpu.pipeline_mode<synchronous>, transform_indices = @transform_0, window_bounds = array<i64: 27, 2048>}, {pipeline_mode = #tpu.pipeline_mode<synchronous>, transform_indices = @transform_1, window_bounds = array<i64: 16, 27>}, {pipeline_mode = #tpu.pipeline_mode<synchronous>, transform_indices = @transform_2, window_bounds = array<i64: 16, 1>}, {pipeline_mode = #tpu.pipeline_mode<synchronous>, transform_indices = @transform_3, window_bounds = array<i64: 16, 32>}, {pipeline_mode = #tpu.pipeline_mode<synchronous>, transform_indices = @transform_4, window_bounds = array<i64: 1, 32>}, {pipeline_mode = #tpu.pipeline_mode<synchronous>, transform_indices = @transform_5, window_bounds = array<i64: 8, 32>}]} {
    %c0 = arith.constant 0 : index
    %c0_0 = arith.constant 0 : index
    %0 = vector.load %arg2[%c0, %c0_0] : memref<16x27xbf16, #tpu.memory_space<vmem>>, vector<16x27xbf16>
    %c0_1 = arith.constant 0 : index
    %c0_2 = arith.constant 0 : index
    %1 = vector.load %arg1[%c0_1, %c0_2] : memref<27x2048xbf16, #tpu.memory_space<vmem>>, vector<27x2048xbf16>
    %cst = arith.constant dense<0.000000e+00> : vector<16x2048xf32>
    %2 = tpu.matmul %0, %1, %cst {dimension_numbers = #tpu.dot_dimension_numbers<[1], [0], [0], [1], [0, 0, 1, 1], [], []>} : vector<16x27xbf16>, vector<27x2048xbf16>, vector<16x2048xf32> -> vector<16x2048xf32>
    %c0_3 = arith.constant 0 : index
    %c0_4 = arith.constant 0 : index
    %3 = vector.load %arg3[%c0_3, %c0_4] : memref<16x1xf32, #tpu.memory_space<vmem>>, vector<16x1xf32>
    %4 = vector.broadcast %3 : vector<16x1xf32> to vector<16x2048xf32>
    %5 = arith.addf %2, %4 : vector<16x2048xf32>
    %cst_5 = arith.constant 0.000000e+00 : f32
    %6 = vector.broadcast %cst_5 : f32 to vector<16x2048xf32>
    %7 = arith.maximumf %5, %6 : vector<16x2048xf32>
    %8 = vector.extract_strided_slice %7 {offsets = [0, 0], sizes = [16, 256], strides = [1, 1]} : vector<16x2048xf32> to vector<16x256xf32>
    %cst_6 = arith.constant dense<0.000000e+00> : vector<16xf32>
    %9 = vector.multi_reduction <add>, %8, %cst_6 [1] : vector<16x256xf32> to vector<16xf32>
    %10 = vector.shape_cast %9 : vector<16xf32> to vector<16x1xf32>
    %11 = vector.extract_strided_slice %7 {offsets = [0, 256], sizes = [16, 256], strides = [1, 1]} : vector<16x2048xf32> to vector<16x256xf32>
    %cst_7 = arith.constant dense<0.000000e+00> : vector<16xf32>
    %12 = vector.multi_reduction <add>, %11, %cst_7 [1] : vector<16x256xf32> to vector<16xf32>
    %13 = vector.shape_cast %12 : vector<16xf32> to vector<16x1xf32>
    %14 = vector.extract_strided_slice %7 {offsets = [0, 512], sizes = [16, 256], strides = [1, 1]} : vector<16x2048xf32> to vector<16x256xf32>
    %cst_8 = arith.constant dense<0.000000e+00> : vector<16xf32>
    %15 = vector.multi_reduction <add>, %14, %cst_8 [1] : vector<16x256xf32> to vector<16xf32>
    %16 = vector.shape_cast %15 : vector<16xf32> to vector<16x1xf32>
    %17 = vector.extract_strided_slice %7 {offsets = [0, 768], sizes = [16, 256], strides = [1, 1]} : vector<16x2048xf32> to vector<16x256xf32>
    %cst_9 = arith.constant dense<0.000000e+00> : vector<16xf32>
    %18 = vector.multi_reduction <add>, %17, %cst_9 [1] : vector<16x256xf32> to vector<16xf32>
    %19 = vector.shape_cast %18 : vector<16xf32> to vector<16x1xf32>
    %20 = vector.extract_strided_slice %7 {offsets = [0, 1024], sizes = [16, 256], strides = [1, 1]} : vector<16x2048xf32> to vector<16x256xf32>
    %cst_10 = arith.constant dense<0.000000e+00> : vector<16xf32>
    %21 = vector.multi_reduction <add>, %20, %cst_10 [1] : vector<16x256xf32> to vector<16xf32>
    %22 = vector.shape_cast %21 : vector<16xf32> to vector<16x1xf32>
    %23 = vector.extract_strided_slice %7 {offsets = [0, 1280], sizes = [16, 256], strides = [1, 1]} : vector<16x2048xf32> to vector<16x256xf32>
    %cst_11 = arith.constant dense<0.000000e+00> : vector<16xf32>
    %24 = vector.multi_reduction <add>, %23, %cst_11 [1] : vector<16x256xf32> to vector<16xf32>
    %25 = vector.shape_cast %24 : vector<16xf32> to vector<16x1xf32>
    %26 = vector.extract_strided_slice %7 {offsets = [0, 1536], sizes = [16, 256], strides = [1, 1]} : vector<16x2048xf32> to vector<16x256xf32>
    %cst_12 = arith.constant dense<0.000000e+00> : vector<16xf32>
    %27 = vector.multi_reduction <add>, %26, %cst_12 [1] : vector<16x256xf32> to vector<16xf32>
    %28 = vector.shape_cast %27 : vector<16xf32> to vector<16x1xf32>
    %29 = vector.extract_strided_slice %7 {offsets = [0, 1792], sizes = [16, 256], strides = [1, 1]} : vector<16x2048xf32> to vector<16x256xf32>
    %cst_13 = arith.constant dense<0.000000e+00> : vector<16xf32>
    %30 = vector.multi_reduction <add>, %29, %cst_13 [1] : vector<16x256xf32> to vector<16xf32>
    %31 = vector.shape_cast %30 : vector<16xf32> to vector<16x1xf32>
    %32 = tpu.concatenate %10, %13, %16, %19, %22, %25, %28, %31 in 1 : vector<16x1xf32>, vector<16x1xf32>, vector<16x1xf32>, vector<16x1xf32>, vector<16x1xf32>, vector<16x1xf32>, vector<16x1xf32>, vector<16x1xf32> -> vector<16x8xf32>
    %cst_14 = arith.constant 3.906250e-03 : f32
    %33 = vector.broadcast %cst_14 : f32 to vector<16x8xf32>
    %34 = arith.mulf %32, %33 : vector<16x8xf32>
    %35 = tpu.transpose %34, [1, 0] : vector<16x8xf32> -> vector<8x16xf32>
    %c0_15 = arith.constant 0 : index
    %c0_16 = arith.constant 0 : index
    %36 = vector.load %arg4[%c0_15, %c0_16] : memref<16x32xf32, #tpu.memory_space<vmem>>, vector<16x32xf32>
    %cst_17 = arith.constant dense<0.000000e+00> : vector<8x32xf32>
    %37 = tpu.matmul %35, %36, %cst_17 {dimension_numbers = #tpu.dot_dimension_numbers<[1], [0], [0], [1], [0, 0, 1, 1], [], []>} : vector<8x16xf32>, vector<16x32xf32>, vector<8x32xf32> -> vector<8x32xf32>
    %c0_18 = arith.constant 0 : index
    %c0_19 = arith.constant 0 : index
    %38 = vector.load %arg5[%c0_18, %c0_19] : memref<1x32xf32, #tpu.memory_space<vmem>>, vector<1x32xf32>
    %39 = vector.broadcast %38 : vector<1x32xf32> to vector<8x32xf32>
    %40 = arith.addf %37, %39 : vector<8x32xf32>
    %c0_20 = arith.constant 0 : index
    %c0_21 = arith.constant 0 : index
    %41 = vector.load %arg6[%c0_20, %c0_21] : memref<8x32xf32, #tpu.memory_space<vmem>>, vector<8x32xf32>
    tpu.vector_store %arg6[%c0_20, %c0_21], %40 {strides = array<i32>} : memref<8x32xf32, #tpu.memory_space<vmem>>, vector<8x32xf32>,
    return
  }
  func.func @transform_0(%arg0: i32) -> (i32, i32) {
    %c0_i32 = arith.constant 0 : i32
    %c0_i32_0 = arith.constant 0 : i32
    %c0_i32_1 = arith.constant 0 : i32
    return %c0_i32, %c0_i32_0 : i32, i32
  }
  func.func @transform_1(%arg0: i32) -> (i32, i32) {
    %c0_i32 = arith.constant 0 : i32
    %c0_i32_0 = arith.constant 0 : i32
    %c0_i32_1 = arith.constant 0 : i32
    return %c0_i32, %c0_i32_0 : i32, i32
  }
  func.func @transform_2(%arg0: i32) -> (i32, i32) {
    %c0_i32 = arith.constant 0 : i32
    %c0_i32_0 = arith.constant 0 : i32
    %c0_i32_1 = arith.constant 0 : i32
    return %c0_i32, %c0_i32_0 : i32, i32
  }
  func.func @transform_3(%arg0: i32) -> (i32, i32) {
    %c0_i32 = arith.constant 0 : i32
    %c0_i32_0 = arith.constant 0 : i32
    %c0_i32_1 = arith.constant 0 : i32
    return %c0_i32, %c0_i32_0 : i32, i32
  }
  func.func @transform_4(%arg0: i32) -> (i32, i32) {
    %c0_i32 = arith.constant 0 : i32
    %c0_i32_0 = arith.constant 0 : i32
    %c0_i32_1 = arith.constant 0 : i32
    return %c0_i32, %c0_i32_0 : i32, i32
  }
  func.func @transform_5(%arg0: i32) -> (i32, i32) {
    %c0_i32 = arith.constant 0 : i32
    %c0_i32_0 = arith.constant 0 : i32
    %c0_i32_1 = arith.constant 0 : i32
    return %c0_i32, %c0_i32_0 : i32, i32
  }
}

</mosaic_0001>

<llo_original>
// kernel: conv_lstm_forward.1
$region0: #{conv_lstm_forward.1}
  #allocation0 [shape = 'u32[]', space=smem, size = 0x4, offset = 0x4, fixed_abs, tag = 'smem constant byte address 0x4 - core index']
  #allocation1 [shape = 'u32[72,128]{1,0:T(1,128)}', space=vmem, size = 0x9000, scoped, tag = 'internal scratch']
  %s0 = inlined_call_operand.vmem [shape: bf16[27,2048], index: 0, kind: input, shape index: {}]
  %s1 = inlined_call_operand.vmem [shape: bf16[16,27], index: 1, kind: input, shape index: {}]
  %s2 = inlined_call_operand.vmem [shape: f32[16,1], index: 2, kind: input, shape index: {}]
  %s3 = inlined_call_operand.vmem [shape: f32[16,32], index: 3, kind: input, shape index: {}]
  %s4 = inlined_call_operand.vmem [shape: f32[1,32], index: 4, kind: input, shape index: {}]
  %s5 = inlined_call_operand.hbm [shape: f32[8,32], index: 5, kind: output, shape index: {}]
  %s6 = sld [smem:[#allocation0]]
  $region30: #{conv_lstm_forward.1} parent=0
    _
  %s8 = ssub.s32 1, %s6
  %s9 = scalar_select 0, %s8, %s6
  $region1: #{conv_lstm_forward.1} parent=0
    #allocation2 [shape = 'u8[4096]{0}', space=vmem, size = 0x1000, scoped, tag = 'output window, operand 0, single buffered']
    #allocation3 [shape = 's32[1]{0}', space=sflag, size = 0x4, scoped, tag = 'scoped memory for conv_lstm_forward.1']
    %10 = vsyncpa [#allocation3], 0
    // Predicated region
    $region2: #{conv_lstm_forward.1} parent=1 // pred_check
      _
    $region3: #{conv_lstm_forward.1} parent=1 // pred_check_branch
      %12 = sbr.rel (0) target = $region5
    $region4: #{conv_lstm_forward.1} parent=1 // pred_region
      _
    $region5: #{conv_lstm_forward.1} parent=1 // pred_fallthru
      _
    // Predicated region
    $region6: #{conv_lstm_forward.1} parent=1 // pred_check
      _
    $region7: #{conv_lstm_forward.1} parent=1 // pred_check_branch
      %14 = sbr.rel (0) target = $region9
    $region8: #{conv_lstm_forward.1} parent=1 // pred_region
      _
    $region9: #{conv_lstm_forward.1} parent=1 // pred_fallthru
      _
    // Predicated region
    $region10: #{conv_lstm_forward.1} parent=1 // pred_check
      _
    $region11: #{conv_lstm_forward.1} parent=1 // pred_check_branch
      %16 = sbr.rel (0) target = $region13
    $region12: #{conv_lstm_forward.1} parent=1 // pred_region
      _
    $region13: #{conv_lstm_forward.1} parent=1 // pred_fallthru
      _
    // Predicated region
    $region14: #{conv_lstm_forward.1} parent=1 // pred_check
      _
    $region15: #{conv_lstm_forward.1} parent=1 // pred_check_branch
      %18 = sbr.rel (0) target = $region17
    $region16: #{conv_lstm_forward.1} parent=1 // pred_region
      _
    $region17: #{conv_lstm_forward.1} parent=1 // pred_fallthru
      _
    // Predicated region
    $region18: #{conv_lstm_forward.1} parent=1 // pred_check
      _
    $region19: #{conv_lstm_forward.1} parent=1 // pred_check_branch
      %20 = sbr.rel (0) target = $region21
    $region20: #{conv_lstm_forward.1} parent=1 // pred_region
      _
    $region21: #{conv_lstm_forward.1} parent=1 // pred_fallthru
      _
    %v22 = vld [vmem:[%s1] sm:$0xf]
    %v23 = vld [vmem:[%s1 + $0x4] sm:$0xf]
    %v24 = vld [vmem:[%s0] sm:$0xff]
    %v25 = vld [vmem:[%s0 + $0x8] sm:$0xff]
    %v26 = vld [vmem:[%s0 + $0x10] sm:$0xff]
    %v27 = vld [vmem:[%s0 + $0x18] sm:$0xff]
    %v28 = vld [vmem:[%s0 + $0x20] sm:$0xff]
    %v29 = vld [vmem:[%s0 + $0x28] sm:$0xff]
    %v30 = vld [vmem:[%s0 + $0x30] sm:$0xff]
    %v31 = vld [vmem:[%s0 + $0x38] sm:$0xff]
    %v32 = vld [vmem:[%s0 + $0x40] sm:$0xff]
    %v33 = vld [vmem:[%s0 + $0x48] sm:$0xff]
    %v34 = vld [vmem:[%s0 + $0x50] sm:$0xff]
    %v35 = vld [vmem:[%s0 + $0x58] sm:$0xff]
    %v36 = vld [vmem:[%s0 + $0x60] sm:$0xff]
    %v37 = vld [vmem:[%s0 + $0x68] sm:$0xff]
    %v38 = vld [vmem:[%s0 + $0x70] sm:$0xff]
    %v39 = vld [vmem:[%s0 + $0x78] sm:$0xff]
    %v40 = vld [vmem:[%s0 + $0x80] sm:$0xff]
    %v41 = vld [vmem:[%s0 + $0x88] sm:$0xff]
    %v42 = vld [vmem:[%s0 + $0x90] sm:$0xff]
    %v43 = vld [vmem:[%s0 + $0x98] sm:$0xff]
    %v44 = vld [vmem:[%s0 + $0xa0] sm:$0xff]
    %v45 = vld [vmem:[%s0 + $0xa8] sm:$0xff]
    %v46 = vld [vmem:[%s0 + $0xb0] sm:$0xff]
    %v47 = vld [vmem:[%s0 + $0xb8] sm:$0xff]
    %v48 = vld [vmem:[%s0 + $0xc0] sm:$0x33]
    %v49 = vld [vmem:[%s0 + $0xc8] sm:$0x33]
    %v50 = vld [vmem:[%s0 + $0xd0] sm:$0x33]
    %v51 = vld [vmem:[%s0 + $0xd8] sm:$0x33]
    %v52 = vld [vmem:[%s0 + $0xe0] sm:$0x33]
    %v53 = vld [vmem:[%s0 + $0xe8] sm:$0x33]
    %v54 = vld [vmem:[%s0 + $0xf0] sm:$0x33]
    %v55 = vld [vmem:[%s0 + $0xf8] sm:$0x33]
    %v56 = vld [vmem:[%s2] sm:$0xff]
    %v57 = vld [vmem:[%s2 + $0x8] sm:$0xff]
    %59 = vset.pattern.permute.xlu0 0
    %60 = vperm.xlu0 %59, %v56
    %v61 = vpop.permute.xlu0 %60
    %64 = vset.pattern.permute.xlu0 0
    %65 = vperm.xlu0 %64, %v57
    %v66 = vpop.permute.xlu0 %65
    %v70 = vunpack.c.l.b16 %v22
    %v71 = vunpack.c.l.b16 %v23
    %v72 = vpack.c.b16 %v71, %v70
    %v105 = vunpack.c.l.b16 %v24
    %v106 = vunpack.c.h.b16 %v24
    %v107 = vunpack.c.l.b16 %v25
    %v108 = vunpack.c.h.b16 %v25
    %v109 = vunpack.c.l.b16 %v26
    %v110 = vunpack.c.h.b16 %v26
    %v111 = vunpack.c.l.b16 %v27
    %v112 = vunpack.c.h.b16 %v27
    %v113 = vunpack.c.l.b16 %v28
    %v114 = vunpack.c.h.b16 %v28
    %v115 = vunpack.c.l.b16 %v29
    %v116 = vunpack.c.h.b16 %v29
    %v117 = vunpack.c.l.b16 %v30
    %v118 = vunpack.c.h.b16 %v30
    %v119 = vunpack.c.l.b16 %v31
    %v120 = vunpack.c.h.b16 %v31
    %v121 = vunpack.c.l.b16 %v32
    %v122 = vunpack.c.h.b16 %v32
    %v123 = vunpack.c.l.b16 %v33
    %v124 = vunpack.c.h.b16 %v33
    %v125 = vunpack.c.l.b16 %v34
    %v126 = vunpack.c.h.b16 %v34
    %v127 = vunpack.c.l.b16 %v35
    %v128 = vunpack.c.h.b16 %v35
    %v129 = vunpack.c.l.b16 %v36
    %v130 = vunpack.c.h.b16 %v36
    %v131 = vunpack.c.l.b16 %v37
    %v132 = vunpack.c.h.b16 %v37
    %v133 = vunpack.c.l.b16 %v38
    %v134 = vunpack.c.h.b16 %v38
    %v135 = vunpack.c.l.b16 %v39
    %v136 = vunpack.c.h.b16 %v39
    %v137 = vunpack.c.l.b16 %v40
    %v138 = vunpack.c.h.b16 %v40
    %v139 = vunpack.c.l.b16 %v41
    %v140 = vunpack.c.h.b16 %v41
    %v141 = vunpack.c.l.b16 %v42
    %v142 = vunpack.c.h.b16 %v42
    %v143 = vunpack.c.l.b16 %v43
    %v144 = vunpack.c.h.b16 %v43
    %v145 = vunpack.c.l.b16 %v44
    %v146 = vunpack.c.h.b16 %v44
    %v147 = vunpack.c.l.b16 %v45
    %v148 = vunpack.c.h.b16 %v45
    %v149 = vunpack.c.l.b16 %v46
    %v150 = vunpack.c.h.b16 %v46
    %v151 = vunpack.c.l.b16 %v47
    %v152 = vunpack.c.h.b16 %v47
    %v153 = vunpack.c.l.b16 %v48
    %v154 = vunpack.c.h.b16 %v48
    %v155 = vunpack.c.l.b16 %v49
    %v156 = vunpack.c.h.b16 %v49
    %v157 = vunpack.c.l.b16 %v50
    %v158 = vunpack.c.h.b16 %v50
    %v159 = vunpack.c.l.b16 %v51
    %v160 = vunpack.c.h.b16 %v51
    %v161 = vunpack.c.l.b16 %v52
    %v162 = vunpack.c.h.b16 %v52
    %v163 = vunpack.c.l.b16 %v53
    %v164 = vunpack.c.h.b16 %v53
    %v165 = vunpack.c.l.b16 %v54
    %v166 = vunpack.c.h.b16 %v54
    %v167 = vunpack.c.l.b16 %v55
    %v168 = vunpack.c.h.b16 %v55
    %v169 = vpack.c.b16 %v121, %v105
    %v170 = vpack.c.b16 %v122, %v106
    %v171 = vpack.c.b16 %v123, %v107
    %v172 = vpack.c.b16 %v124, %v108
    %v173 = vpack.c.b16 %v125, %v109
    %v174 = vpack.c.b16 %v126, %v110
    %v175 = vpack.c.b16 %v127, %v111
    %v176 = vpack.c.b16 %v128, %v112
    %v177 = vpack.c.b16 %v129, %v113
    %v178 = vpack.c.b16 %v130, %v114
    %v179 = vpack.c.b16 %v131, %v115
    %v180 = vpack.c.b16 %v132, %v116
    %v181 = vpack.c.b16 %v133, %v117
    %v182 = vpack.c.b16 %v134, %v118
    %v183 = vpack.c.b16 %v135, %v119
    %v184 = vpack.c.b16 %v136, %v120
    %v185 = vpack.c.b16 %v153, %v137
    %v186 = vpack.c.b16 %v154, %v138
    %v187 = vpack.c.b16 %v155, %v139
    %v188 = vpack.c.b16 %v156, %v140
    %v189 = vpack.c.b16 %v157, %v141
    %v190 = vpack.c.b16 %v158, %v142
    %v191 = vpack.c.b16 %v159, %v143
    %v192 = vpack.c.b16 %v160, %v144
    %v193 = vpack.c.b16 %v161, %v145
    %v194 = vpack.c.b16 %v162, %v146
    %v195 = vpack.c.b16 %v163, %v147
    %v196 = vpack.c.b16 %v164, %v148
    %v197 = vpack.c.b16 %v165, %v149
    %v198 = vpack.c.b16 %v166, %v150
    %v199 = vpack.c.b16 %v167, %v151
    %v200 = vpack.c.b16 %v168, %v152
    %vm217 = vcmask 220160
    %v219 = vsel %vm217, %v72, 0
    %vm221 = vcmask 1044480
    %vm222 = vcmask 1045504
    %v223 = vsel %vm221, 4294967295, 65535
    %v224 = vsel %vm222, %v223, 0
    %v226 = vand.u32 %v185, %v224
    %v229 = vand.u32 %v186, %v224
    %v232 = vand.u32 %v187, %v224
    %v235 = vand.u32 %v188, %v224
    %v238 = vand.u32 %v189, %v224
    %v241 = vand.u32 %v190, %v224
    %v244 = vand.u32 %v191, %v224
    %v247 = vand.u32 %v192, %v224
    %v250 = vand.u32 %v193, %v224
    %v253 = vand.u32 %v194, %v224
    %v256 = vand.u32 %v195, %v224
    %v259 = vand.u32 %v196, %v224
    %v262 = vand.u32 %v197, %v224
    %v265 = vand.u32 %v198, %v224
    %v268 = vand.u32 %v199, %v224
    %v271 = vand.u32 %v200, %v224
    %273 = vmatpush.bf16.msra.mxu0 0
    %274 = vmatpush.bf16.msra.mxu0 0
    %275 = vmatpush.bf16.msra.mxu0 0
    %276 = vmatpush.bf16.msra.mxu0 0
    %277 = vmatpush.bf16.msra.mxu0 0
    %278 = vmatpush.bf16.msra.mxu0 0
    %279 = vmatpush.bf16.msra.mxu0 %v226
    %280 = vmatpush.bf16.msra.mxu0 %v169
    %281 = vmatmul.bf16.gmra.mxu0 %v219
    %v282 = vpop.f32.mrf.mxu0
    %v283 = vadd.f32 %v61, %v282
    %v284 = vpop.f32.mrf.mxu0
    %v285 = vadd.f32 %v66, %v284
    %286 = vdwg.mxu0
    %287 = vmatpush.bf16.msra.mxu0 0
    %288 = vmatpush.bf16.msra.mxu0 0
    %289 = vmatpush.bf16.msra.mxu0 0
    %290 = vmatpush.bf16.msra.mxu0 0
    %291 = vmatpush.bf16.msra.mxu0 0
    %292 = vmatpush.bf16.msra.mxu0 0
    %293 = vmatpush.bf16.msra.mxu0 %v229
    %294 = vmatpush.bf16.msra.mxu0 %v170
    %295 = vmatmul.bf16.gmra.mxu0 %v219
    %v296 = vpop.f32.mrf.mxu0
    %v297 = vadd.f32 %v61, %v296
    %v298 = vpop.f32.mrf.mxu0
    %v299 = vadd.f32 %v66, %v298
    %300 = vdwg.mxu0
    %301 = vmatpush.bf16.msra.mxu0 0
    %302 = vmatpush.bf16.msra.mxu0 0
    %303 = vmatpush.bf16.msra.mxu0 0
    %304 = vmatpush.bf16.msra.mxu0 0
    %305 = vmatpush.bf16.msra.mxu0 0
    %306 = vmatpush.bf16.msra.mxu0 0
    %307 = vmatpush.bf16.msra.mxu0 %v232
    %308 = vmatpush.bf16.msra.mxu0 %v171
    %309 = vmatmul.bf16.gmra.mxu0 %v219
    %v310 = vpop.f32.mrf.mxu0
    %v311 = vadd.f32 %v61, %v310
    %v312 = vpop.f32.mrf.mxu0
    %v313 = vadd.f32 %v66, %v312
    %314 = vdwg.mxu0
    %315 = vmatpush.bf16.msra.mxu0 0
    %316 = vmatpush.bf16.msra.mxu0 0
    %317 = vmatpush.bf16.msra.mxu0 0
    %318 = vmatpush.bf16.msra.mxu0 0
    %319 = vmatpush.bf16.msra.mxu0 0
    %320 = vmatpush.bf16.msra.mxu0 0
    %321 = vmatpush.bf16.msra.mxu0 %v235
    %322 = vmatpush.bf16.msra.mxu0 %v172
    %323 = vmatmul.bf16.gmra.mxu0 %v219
    %v324 = vpop.f32.mrf.mxu0
    %v325 = vadd.f32 %v61, %v324
    %v326 = vpop.f32.mrf.mxu0
    %v327 = vadd.f32 %v66, %v326
    %328 = vdwg.mxu0
    %329 = vmatpush.bf16.msra.mxu0 0
    %330 = vmatpush.bf16.msra.mxu0 0
    %331 = vmatpush.bf16.msra.mxu0 0
    %332 = vmatpush.bf16.msra.mxu0 0
    %333 = vmatpush.bf16.msra.mxu0 0
    %334 = vmatpush.bf16.msra.mxu0 0
    %335 = vmatpush.bf16.msra.mxu0 %v238
    %336 = vmatpush.bf16.msra.mxu0 %v173
    %337 = vmatmul.bf16.gmra.mxu0 %v219
    %v338 = vpop.f32.mrf.mxu0
    %v339 = vadd.f32 %v61, %v338
    %v340 = vpop.f32.mrf.mxu0
    %v341 = vadd.f32 %v66, %v340
    %342 = vdwg.mxu0
    %343 = vmatpush.bf16.msra.mxu0 0
    %344 = vmatpush.bf16.msra.mxu0 0
    %345 = vmatpush.bf16.msra.mxu0 0
    %346 = vmatpush.bf16.msra.mxu0 0
    %347 = vmatpush.bf16.msra.mxu0 0
    %348 = vmatpush.bf16.msra.mxu0 0
    %349 = vmatpush.bf16.msra.mxu0 %v241
    %350 = vmatpush.bf16.msra.mxu0 %v174
    %351 = vmatmul.bf16.gmra.mxu0 %v219
    %v352 = vpop.f32.mrf.mxu0
    %v353 = vadd.f32 %v61, %v352
    %v354 = vpop.f32.mrf.mxu0
    %v355 = vadd.f32 %v66, %v354
    %356 = vdwg.mxu0
    %357 = vmatpush.bf16.msra.mxu0 0
    %358 = vmatpush.bf16.msra.mxu0 0
    %359 = vmatpush.bf16.msra.mxu0 0
    %360 = vmatpush.bf16.msra.mxu0 0
    %361 = vmatpush.bf16.msra.mxu0 0
    %362 = vmatpush.bf16.msra.mxu0 0
    %363 = vmatpush.bf16.msra.mxu0 %v244
    %364 = vmatpush.bf16.msra.mxu0 %v175
    %365 = vmatmul.bf16.gmra.mxu0 %v219
    %v366 = vpop.f32.mrf.mxu0
    %v367 = vadd.f32 %v61, %v366
    %v368 = vpop.f32.mrf.mxu0
    %v369 = vadd.f32 %v66, %v368
    %370 = vdwg.mxu0
    %371 = vmatpush.bf16.msra.mxu0 0
    %372 = vmatpush.bf16.msra.mxu0 0
    %373 = vmatpush.bf16.msra.mxu0 0
    %374 = vmatpush.bf16.msra.mxu0 0
    %375 = vmatpush.bf16.msra.mxu0 0
    %376 = vmatpush.bf16.msra.mxu0 0
    %377 = vmatpush.bf16.msra.mxu0 %v247
    %378 = vmatpush.bf16.msra.mxu0 %v176
    %379 = vmatmul.bf16.gmra.mxu0 %v219
    %v380 = vpop.f32.mrf.mxu0
    %v381 = vadd.f32 %v61, %v380
    %v382 = vpop.f32.mrf.mxu0
    %v383 = vadd.f32 %v66, %v382
    %384 = vdwg.mxu0
    %385 = vmatpush.bf16.msra.mxu0 0
    %386 = vmatpush.bf16.msra.mxu0 0
    %387 = vmatpush.bf16.msra.mxu0 0
    %388 = vmatpush.bf16.msra.mxu0 0
    %389 = vmatpush.bf16.msra.mxu0 0
    %390 = vmatpush.bf16.msra.mxu0 0
    %391 = vmatpush.bf16.msra.mxu0 %v250
    %392 = vmatpush.bf16.msra.mxu0 %v177
    %393 = vmatmul.bf16.gmra.mxu0 %v219
    %v394 = vpop.f32.mrf.mxu0
    %v395 = vadd.f32 %v61, %v394
    %v396 = vpop.f32.mrf.mxu0
    %v397 = vadd.f32 %v66, %v396
    %398 = vdwg.mxu0
    %399 = vmatpush.bf16.msra.mxu0 0
    %400 = vmatpush.bf16.msra.mxu0 0
    %401 = vmatpush.bf16.msra.mxu0 0
    %402 = vmatpush.bf16.msra.mxu0 0
    %403 = vmatpush.bf16.msra.mxu0 0
    %404 = vmatpush.bf16.msra.mxu0 0
    %405 = vmatpush.bf16.msra.mxu0 %v253
    %406 = vmatpush.bf16.msra.mxu0 %v178
    %407 = vmatmul.bf16.gmra.mxu0 %v219
    %v408 = vpop.f32.mrf.mxu0
    %v409 = vadd.f32 %v61, %v408
    %v410 = vpop.f32.mrf.mxu0
    %v411 = vadd.f32 %v66, %v410
    %412 = vdwg.mxu0
    %413 = vmatpush.bf16.msra.mxu0 0
    %414 = vmatpush.bf16.msra.mxu0 0
    %415 = vmatpush.bf16.msra.mxu0 0
    %416 = vmatpush.bf16.msra.mxu0 0
    %417 = vmatpush.bf16.msra.mxu0 0
    %418 = vmatpush.bf16.msra.mxu0 0
    %419 = vmatpush.bf16.msra.mxu0 %v256
    %420 = vmatpush.bf16.msra.mxu0 %v179
    %421 = vmatmul.bf16.gmra.mxu0 %v219
    %v422 = vpop.f32.mrf.mxu0
    %v423 = vadd.f32 %v61, %v422
    %v424 = vpop.f32.mrf.mxu0
    %v425 = vadd.f32 %v66, %v424
    %426 = vdwg.mxu0
    %427 = vmatpush.bf16.msra.mxu0 0
    %428 = vmatpush.bf16.msra.mxu0 0
    %429 = vmatpush.bf16.msra.mxu0 0
    %430 = vmatpush.bf16.msra.mxu0 0
    %431 = vmatpush.bf16.msra.mxu0 0
    %432 = vmatpush.bf16.msra.mxu0 0
    %433 = vmatpush.bf16.msra.mxu0 %v259
    %434 = vmatpush.bf16.msra.mxu0 %v180
    %435 = vmatmul.bf16.gmra.mxu0 %v219
    %v436 = vpop.f32.mrf.mxu0
    %v437 = vadd.f32 %v61, %v436
    %v438 = vpop.f32.mrf.mxu0
    %v439 = vadd.f32 %v66, %v438
    %440 = vdwg.mxu0
    %441 = vmatpush.bf16.msra.mxu0 0
    %442 = vmatpush.bf16.msra.mxu0 0
    %443 = vmatpush.bf16.msra.mxu0 0
    %444 = vmatpush.bf16.msra.mxu0 0
    %445 = vmatpush.bf16.msra.mxu0 0
    %446 = vmatpush.bf16.msra.mxu0 0
    %447 = vmatpush.bf16.msra.mxu0 %v262
    %448 = vmatpush.bf16.msra.mxu0 %v181
    %449 = vmatmul.bf16.gmra.mxu0 %v219
    %v450 = vpop.f32.mrf.mxu0
    %v451 = vadd.f32 %v61, %v450
    %v452 = vpop.f32.mrf.mxu0
    %v453 = vadd.f32 %v66, %v452
    %454 = vdwg.mxu0
    %455 = vmatpush.bf16.msra.mxu0 0
    %456 = vmatpush.bf16.msra.mxu0 0
    %457 = vmatpush.bf16.msra.mxu0 0
    %458 = vmatpush.bf16.msra.mxu0 0
    %459 = vmatpush.bf16.msra.mxu0 0
    %460 = vmatpush.bf16.msra.mxu0 0
    %461 = vmatpush.bf16.msra.mxu0 %v265
    %462 = vmatpush.bf16.msra.mxu0 %v182
    %463 = vmatmul.bf16.gmra.mxu0 %v219
    %v464 = vpop.f32.mrf.mxu0
    %v465 = vadd.f32 %v61, %v464
    %v466 = vpop.f32.mrf.mxu0
    %v467 = vadd.f32 %v66, %v466
    %468 = vdwg.mxu0
    %469 = vmatpush.bf16.msra.mxu0 0
    %470 = vmatpush.bf16.msra.mxu0 0
    %471 = vmatpush.bf16.msra.mxu0 0
    %472 = vmatpush.bf16.msra.mxu0 0
    %473 = vmatpush.bf16.msra.mxu0 0
    %474 = vmatpush.bf16.msra.mxu0 0
    %475 = vmatpush.bf16.msra.mxu0 %v268
    %476 = vmatpush.bf16.msra.mxu0 %v183
    %477 = vmatmul.bf16.gmra.mxu0 %v219
    %v478 = vpop.f32.mrf.mxu0
    %v479 = vadd.f32 %v61, %v478
    %v480 = vpop.f32.mrf.mxu0
    %v481 = vadd.f32 %v66, %v480
    %482 = vdwg.mxu0
    %483 = vmatpush.bf16.msra.mxu0 0
    %484 = vmatpush.bf16.msra.mxu0 0
    %485 = vmatpush.bf16.msra.mxu0 0
    %486 = vmatpush.bf16.msra.mxu0 0
    %487 = vmatpush.bf16.msra.mxu0 0
    %488 = vmatpush.bf16.msra.mxu0 0
    %489 = vmatpush.bf16.msra.mxu0 %v271
    %490 = vmatpush.bf16.msra.mxu0 %v184
    %491 = vmatmul.bf16.gmra.mxu0 %v219
    %v492 = vpop.f32.mrf.mxu0
    %v493 = vadd.f32 %v61, %v492
    %v494 = vpop.f32.mrf.mxu0
    %v495 = vadd.f32 %v66, %v494
    %496 = vdwg.mxu0
    %v497 = vmax.f32 %v283, 0.0
    %v498 = vmax.f32 %v297, 0.0
    %v499 = vmax.f32 %v311, 0.0
    %v500 = vmax.f32 %v325, 0.0
    %v501 = vmax.f32 %v339, 0.0
    %v502 = vmax.f32 %v353, 0.0
    %v503 = vmax.f32 %v367, 0.0
    %v504 = vmax.f32 %v381, 0.0
    %v505 = vmax.f32 %v395, 0.0
    %v506 = vmax.f32 %v409, 0.0
    %v507 = vmax.f32 %v423, 0.0
    %v508 = vmax.f32 %v437, 0.0
    %v509 = vmax.f32 %v451, 0.0
    %v510 = vmax.f32 %v465, 0.0
    %v511 = vmax.f32 %v479, 0.0
    %v512 = vmax.f32 %v493, 0.0
    %v513 = vmax.f32 %v285, 0.0
    %v514 = vmax.f32 %v299, 0.0
    %v515 = vmax.f32 %v313, 0.0
    %v516 = vmax.f32 %v327, 0.0
    %v517 = vmax.f32 %v341, 0.0
    %v518 = vmax.f32 %v355, 0.0
    %v519 = vmax.f32 %v369, 0.0
    %v520 = vmax.f32 %v383, 0.0
    %v521 = vmax.f32 %v397, 0.0
    %v522 = vmax.f32 %v411, 0.0
    %v523 = vmax.f32 %v425, 0.0
    %v524 = vmax.f32 %v439, 0.0
    %v525 = vmax.f32 %v453, 0.0
    %v526 = vmax.f32 %v467, 0.0
    %v527 = vmax.f32 %v481, 0.0
    %v528 = vmax.f32 %v495, 0.0
    %v529 = vadd.f32 %v497, %v498
    %530 = vadd.xlane.f32.xlu0 %v529
    %v531 = vpop.xlane.xlu0 %530
    %v532 = vadd.f32 %v513, %v514
    %533 = vadd.xlane.f32.xlu0 %v532
    %v534 = vpop.xlane.xlu0 %533
    %v535 = vadd.f32 %v499, %v500
    %536 = vadd.xlane.f32.xlu0 %v535
    %v537 = vpop.xlane.xlu0 %536
    %v538 = vadd.f32 %v515, %v516
    %539 = vadd.xlane.f32.xlu0 %v538
    %v540 = vpop.xlane.xlu0 %539
    %v541 = vadd.f32 %v501, %v502
    %542 = vadd.xlane.f32.xlu0 %v541
    %v543 = vpop.xlane.xlu0 %542
    %v544 = vadd.f32 %v517, %v518
    %545 = vadd.xlane.f32.xlu0 %v544
    %v546 = vpop.xlane.xlu0 %545
    %v547 = vadd.f32 %v503, %v504
    %548 = vadd.xlane.f32.xlu0 %v547
    %v549 = vpop.xlane.xlu0 %548
    %v550 = vadd.f32 %v519, %v520
    %551 = vadd.xlane.f32.xlu0 %v550
    %v552 = vpop.xlane.xlu0 %551
    %v553 = vadd.f32 %v505, %v506
    %554 = vadd.xlane.f32.xlu0 %v553
    %v555 = vpop.xlane.xlu0 %554
    %v556 = vadd.f32 %v521, %v522
    %557 = vadd.xlane.f32.xlu0 %v556
    %v558 = vpop.xlane.xlu0 %557
    %v559 = vadd.f32 %v507, %v508
    %560 = vadd.xlane.f32.xlu0 %v559
    %v561 = vpop.xlane.xlu0 %560
    %v562 = vadd.f32 %v523, %v524
    %563 = vadd.xlane.f32.xlu0 %v562
    %v564 = vpop.xlane.xlu0 %563
    %v565 = vadd.f32 %v509, %v510
    %566 = vadd.xlane.f32.xlu0 %v565
    %v567 = vpop.xlane.xlu0 %566
    %v568 = vadd.f32 %v525, %v526
    %569 = vadd.xlane.f32.xlu0 %v568
    %v570 = vpop.xlane.xlu0 %569
    %v571 = vadd.f32 %v511, %v512
    %572 = vadd.xlane.f32.xlu0 %v571
    %v573 = vpop.xlane.xlu0 %572
    %v574 = vadd.f32 %v527, %v528
    %575 = vadd.xlane.f32.xlu0 %v574
    %v576 = vpop.xlane.xlu0 %575
    %vm577 = vcmask 7168
    %v578 = vsel %vm577, %v531, %v537
    %v579 = vsel %vm577, %v534, %v540
    %vm580 = vcmask 15360
    %v581 = vsel %vm580, %v578, %v543
    %v582 = vsel %vm580, %v579, %v546
    %vm583 = vcmask 23552
    %v584 = vsel %vm583, %v581, %v549
    %v585 = vsel %vm583, %v582, %v552
    %vm586 = vcmask 31744
    %v587 = vsel %vm586, %v584, %v555
    %v588 = vsel %vm586, %v585, %v558
    %vm589 = vcmask 39936
    %v590 = vsel %vm589, %v587, %v561
    %v591 = vsel %vm589, %v588, %v564
    %vm592 = vcmask 48128
    %v593 = vsel %vm592, %v590, %v567
    %v594 = vsel %vm592, %v591, %v570
    %vm595 = vcmask 56320
    %v596 = vsel %vm595, %v593, %v573
    %v597 = vsel %vm595, %v594, %v576
    %v598 = vmul.f32 %v596, 0.00390625
    %v599 = vmul.f32 %v597, 0.00390625
    %600 = vxpose.xlu0.b32.start [1/16] %v598, 128
    %601 = vxpose.xlu0.b32.cont [2/16] %v599, 128
    %602 = vxpose.xlu0.b32.cont [3/16] 0.0, 128
    %603 = vxpose.xlu0.b32.cont [4/16] 0.0, 128
    %604 = vxpose.xlu0.b32.cont [5/16] 0.0, 128
    %605 = vxpose.xlu0.b32.cont [6/16] 0.0, 128
    %606 = vxpose.xlu0.b32.cont [7/16] 0.0, 128
    %607 = vxpose.xlu0.b32.cont [8/16] 0.0, 128
    %608 = vxpose.xlu0.b32.cont [9/16] 0.0, 128
    %609 = vxpose.xlu0.b32.cont [10/16] 0.0, 128
    %610 = vxpose.xlu0.b32.cont [11/16] 0.0, 128
    %611 = vxpose.xlu0.b32.cont [12/16] 0.0, 128
    %612 = vxpose.xlu0.b32.cont [13/16] 0.0, 128
    %613 = vxpose.xlu0.b32.cont [14/16] 0.0, 128
    %614 = vxpose.xlu0.b32.cont [15/16] 0.0, 128
    %615 = vxpose.xlu0.b32.end [16/16] 0.0, 128
    %v616 = vpop.trf.xlu0
    %v617 = vpop.trf.xlu0
    %v618 = vpop.trf.xlu0
    %v619 = vpop.trf.xlu0
    %v620 = vpop.trf.xlu0
    %v621 = vpop.trf.xlu0
    %v622 = vpop.trf.xlu0
    %v623 = vpop.trf.xlu0
    %v624 = vpop.trf.xlu0
    %v625 = vpop.trf.xlu0
    %v626 = vpop.trf.xlu0
    %v627 = vpop.trf.xlu0
    %v628 = vpop.trf.xlu0
    %v629 = vpop.trf.xlu0
    %v630 = vpop.trf.xlu0
    %v631 = vpop.trf.xlu0
    %v632 = vld [vmem:[%s3] sm:$0xff]
    %v633 = vld [vmem:[%s3 + $0x8] sm:$0xff]
    %v634 = vld [vmem:[%s4] sm:$0x1]
    %v636 = vperm.slane %v634, 0
    %vm638 = vcmask 130048
    %v640 = vsel %vm638, %v616, 0
    %642 = vmatpush.msra.mxu0 0.0
    %643 = vmatpush.msra.mxu0 0.0
    %644 = vmatpush.msra.mxu0 0.0
    %645 = vmatpush.msra.mxu0 0.0
    %646 = vmatpush.msra.mxu0 0.0
    %647 = vmatpush.msra.mxu0 0.0
    %648 = vmatpush.msra.mxu0 0.0
    %649 = vmatpush.msra.mxu0 0.0
    %650 = vmatpush.msra.mxu0 0.0
    %651 = vmatpush.msra.mxu0 0.0
    %652 = vmatpush.msra.mxu0 0.0
    %653 = vmatpush.msra.mxu0 0.0
    %654 = vmatpush.msra.mxu0 0.0
    %655 = vmatpush.msra.mxu0 0.0
    %656 = vmatpush.msra.mxu0 %v633
    %657 = vmatpush.msra.mxu0 %v632
    %658 = vmatmul.f32.gmra.mxu0 %v640
    %v659 = vpop.f32.mrf.mxu0
    %v660 = vadd.f32 %v636, %v659
    %661 = vdwg.mxu0
    %vm662 = vcmask 261120
    %663 = vst.msk [vmem:[#allocation2] sm:$0xff] %vm662, %v660
    // Predicated region
    $region22: #{conv_lstm_forward.1} parent=1 // pred_check
      _
    $region23: #{conv_lstm_forward.1} parent=1 // pred_check_branch
      %665 = sbr.rel (0) target = $region25
    $region24: #{conv_lstm_forward.1} parent=1 // pred_region
      %667 = vsyncadd [#allocation3], 0
      %s669 = sshll.u32 [#allocation2], 4
      %s670 = int_to_ptr.vmem [resolvable:$true] %s669
      %s671 = sshll.u32 %s5, 4
      %s672 = int_to_ptr.hbm [resolvable:$true] %s671
      %674 = dma.vmem_to_hbm [thread:$0]  %s670, 128, %s672, [#allocation3]
    $region25: #{conv_lstm_forward.1} parent=1 // pred_fallthru
      _
    // Predicated region
    $region26: #{conv_lstm_forward.1} parent=1 // pred_check
      _
    $region27: #{conv_lstm_forward.1} parent=1 // pred_check_branch
      %676 = sbr.rel (0) target = $region29
    $region28: #{conv_lstm_forward.1} parent=1 // pred_region
      %678 = dma.done [#allocation3], 128
    $region29: #{conv_lstm_forward.1} parent=1 // pred_fallthru
      _
    %679 = vsyncpa [#allocation3], 1

</llo_original>
